<compile_context>
chip_gen: v7x
topology: tpu7x:2x2x1
jax: 0.10.0
libtpu: 0.0.40
codegen_flags: <defaults>
</compile_context>

<pallas_src>
import functools

import numpy as np

import jax
import jax.numpy as jnp
from jax.experimental import pallas as pl
from jax.experimental.pallas import tpu as pltpu


def _decomp_kernel(a_ref, x_ref, res_ref, mean_ref, *, inv_k):
    # a_ref:   (L, L) f32, integer-valued window-count matrix (resident in VMEM).
    # x_ref / res_ref / mean_ref: (Bt, L, TC)
    a = a_ref[...]                       # load once, reused for every batch row
    bt = x_ref.shape[0]
    for b in range(bt):                  # static unroll; wrapper keeps Bt small (<= 8)
        xb = x_ref[b].astype(jnp.float32)                          # (L, TC)
        acc = jnp.dot(a, xb, preferred_element_type=jnp.float32)   # MXU window sums
        mean = acc * inv_k                                         # exact f32 1/k scale
        mean_ref[b] = mean.astype(mean_ref.dtype)
        res_ref[b] = (xb - mean).astype(res_ref.dtype)


def _build_window_count_matrix(L, kernel_size):
    """A[t, s] = #{d in [-pad, pad] : clamp(t + d, 0, L-1) == s}  (edge replication)."""
    pad = (kernel_size - 1) // 2
    rows = np.arange(L)
    cnt = np.zeros((L, L), dtype=np.float64)
    for d in range(-pad, pad + 1):
        cnt[rows, np.clip(rows + d, 0, L - 1)] += 1.0
    return jnp.asarray(cnt, dtype=jnp.float32)


def _vmem_capacity_bytes():
    try:
        return int(pltpu.get_tpu_info().vmem_capacity_bytes)
    except Exception:
        return 64 << 20  # conservative default: assume v7x-sized VMEM


def _vmem_footprint_bytes(L, tc, bt, x_itemsize):
    a_bytes = 2 * L * L * 4                        # resident A block (double-buffered)
    io_bytes = 2 * 3 * bt * L * tc * x_itemsize    # x + res + mean blocks, double-buffered
    tmp_bytes = L * L * 4 + 6 * L * tc * 4         # A value + ~2 iterations of f32 temps
    return a_bytes + io_bytes + tmp_bytes


def _choose_tiles(B, L, C, x_itemsize, target_block_bytes):
    # Channel tile: lane-dense multiple of 128 when C allows it, else one full-C block.
    if C % 128 == 0 and C > 128:
        tc = 128
        while (tc * 2 <= C and C % (tc * 2) == 0
               and L * (tc * 2) * x_itemsize <= target_block_bytes):
            tc *= 2
    else:
        tc = C
    n_c = C // tc

    # Batch tile: fold batches into the block until it reaches the target I/O size
    # (amortizes the ~0.35 us per-grid-step overhead and lengthens DMA descriptors).
    bt = 1
    while (bt * 2 <= B and B % (bt * 2) == 0 and bt * 2 <= 8
           and (bt * 2) * L * tc * x_itemsize <= target_block_bytes):
        bt *= 2

    # Keep >= 2 grid steps on the parallel axes whenever possible so both
    # TensorCores (v7x) / megacore halves get work.
    while bt > 1 and (B // bt) * n_c < 2:
        bt //= 2
    # TODO(synk): for B == 1 with a single channel block the grid is (1, 1); an
    # L-tiling axis with halo (overlapping input blocks) would be needed to use both
    # TensorCores for single-batch inference shapes.
    return bt, tc, n_c


def series_decomp(x, kernel_size):
    """x: (B, L, C) float array. Returns (res, moving_mean), each (B, L, C)."""
    B, L, C = x.shape
    # Even kernel_size is intentionally unsupported: the PyTorch reference would
    # produce a length-(L-1) mean and fail at `res = x - mean`.
    assert kernel_size % 2 == 1, "series_decomp requires an odd kernel_size"

    a = _build_window_count_matrix(L, kernel_size)

    x_itemsize = jnp.dtype(x.dtype).itemsize
    vmem_cap = _vmem_capacity_bytes()
    # Generation-aware block target: smaller on v7x (64 MiB VMEM), larger on v5e/v6e.
    target_block_bytes = (1 << 20) if vmem_cap <= (64 << 20) else (4 << 20)

    bt, tc, n_c = _choose_tiles(B, L, C, x_itemsize, target_block_bytes)
    n_b = B // bt

    footprint = _vmem_footprint_bytes(L, tc, bt, x_itemsize)
    headroom = 4 << 20
    vmem_limit = int(1.25 * footprint) + headroom
    vmem_limit = max(vmem_limit, 32 << 20)                 # never below the usual default
    vmem_limit = min(vmem_limit, (vmem_cap * 3) // 4)      # leave room for Mosaic internals
    vmem_limit = max(vmem_limit, footprint + headroom)     # but never starve the kernel
    # TODO(synk): for very long sequences the (L, L) averaging matrix outgrows VMEM;
    # an L-tiled banded variant (or roll-and-accumulate) would be needed there.

    kernel = functools.partial(_decomp_kernel, inv_k=1.0 / kernel_size)

    res, mean = pl.pallas_call(
        kernel,
        out_shape=(
            jax.ShapeDtypeStruct((B, L, C), x.dtype),
            jax.ShapeDtypeStruct((B, L, C), x.dtype),
        ),
        grid=(n_b, n_c),
        in_specs=[
            pl.BlockSpec((L, L), lambda b, c: (0, 0)),        # A: resident, DMA'd once
            pl.BlockSpec((bt, L, tc), lambda b, c: (b, 0, c)),
        ],
        out_specs=(
            pl.BlockSpec((bt, L, tc), lambda b, c: (b, 0, c)),
            pl.BlockSpec((bt, L, tc), lambda b, c: (b, 0, c)),
        ),
        compiler_params=pltpu.CompilerParams(
            dimension_semantics=("parallel", "parallel"),
            vmem_limit_bytes=vmem_limit),
    )(a, x)
    return res, mean


def _reference(x, kernel_size):
    """Pure-JAX reference matching the PyTorch forward."""
    pad = (kernel_size - 1) // 2
    front = jnp.repeat(x[:, 0:1, :], pad, axis=1)
    end = jnp.repeat(x[:, -1:, :], pad, axis=1)
    xp = jnp.concatenate([front, x, end], axis=1)
    L = x.shape[1]
    mean = jnp.stack(
        [xp[:, t:t + kernel_size, :].mean(axis=1) for t in range(L)], axis=1)
    return x - mean, mean


if __name__ == "__main__":
    B, L, C = 2, 128, 128
    kernel_size = 25  # typical decomposition window; no learnable parameters

    key = jax.random.PRNGKey(0)
    x = jax.random.normal(key, (B, L, C), dtype=jnp.float32)
    # Round inputs to bf16-representable values: with the integer-valued count matrix A,
    # the in-kernel matmul is then exact up to f32 accumulation rounding regardless of
    # the MXU's operand precision, so the 1e-5 self-check below is robust.
    x = x.astype(jnp.bfloat16).astype(jnp.float32)

    res, mean = series_decomp(x, kernel_size)
    res = jax.block_until_ready(res)
    mean = jax.block_until_ready(mean)

    res_ref, mean_ref = _reference(x, kernel_size)
    assert jnp.allclose(mean, mean_ref, atol=1e-5, rtol=1e-5)
    assert jnp.allclose(res, res_ref, atol=1e-5, rtol=1e-5)

    print("KERNEL_OK")
</pallas_src>

<mosaic_0001>
module attributes {stable_mosaic.version = 11 : i64} {
  func.func @_decomp_kernel(%arg0: i32, %arg1: i32, %arg2: memref<128x128xf32, #tpu.memory_space<vmem>>, %arg3: memref<1x128x128xf32, #tpu.memory_space<vmem>>, %arg4: memref<1x128x128xf32, #tpu.memory_space<vmem>>, %arg5: memref<1x128x128xf32, #tpu.memory_space<vmem>>) attributes {dimension_semantics = [#tpu.dimension_semantics<parallel>, #tpu.dimension_semantics<parallel>], iteration_bounds = array<i64: 2, 1>, scalar_prefetch = 0 : i64, scratch_operands = 0 : i64, tpu.core_type = #tpu.core_type<tc>, window_params = [{pipeline_mode = #tpu.pipeline_mode<synchronous>, transform_indices = @transform_0, window_bounds = array<i64: 128, 128>}, {transform_indices = @transform_1, window_bounds = array<i64: 1, 128, 128>}, {transform_indices = @transform_2, window_bounds = array<i64: 1, 128, 128>}, {transform_indices = @transform_3, window_bounds = array<i64: 1, 128, 128>}]} {
    %c0 = arith.constant 0 : index
    %c0_0 = arith.constant 0 : index
    %0 = vector.load %arg2[%c0, %c0_0] : memref<128x128xf32, #tpu.memory_space<vmem>>, vector<128x128xf32>
    %c0_1 = arith.constant 0 : index
    %c0_2 = arith.constant 0 : index
    %c0_3 = arith.constant 0 : index
    %1 = vector.load %arg3[%c0_1, %c0_2, %c0_3] : memref<1x128x128xf32, #tpu.memory_space<vmem>>, vector<1x128x128xf32>
    %2 = vector.shape_cast %1 : vector<1x128x128xf32> to vector<128x128xf32>
    %cst = arith.constant dense<0.000000e+00> : vector<128x128xf32>
    %3 = tpu.matmul %0, %2, %cst {dimension_numbers = #tpu.dot_dimension_numbers<[1], [0], [0], [1], [0, 0, 1, 1], [], []>} : vector<128x128xf32>, vector<128x128xf32>, vector<128x128xf32> -> vector<128x128xf32>
    %cst_4 = arith.constant 4.000000e-02 : f32
    %4 = vector.broadcast %cst_4 : f32 to vector<128x128xf32>
    %5 = arith.mulf %3, %4 : vector<128x128xf32>
    %c0_5 = arith.constant 0 : index
    %c0_6 = arith.constant 0 : index
    %c0_7 = arith.constant 0 : index
    %6 = vector.load %arg5[%c0_5, %c0_6, %c0_7] : memref<1x128x128xf32, #tpu.memory_space<vmem>>, vector<1x128x128xf32>
    %7 = vector.shape_cast %6 : vector<1x128x128xf32> to vector<128x128xf32>
    %8 = vector.shape_cast %5 : vector<128x128xf32> to vector<1x128x128xf32>
    tpu.vector_store %arg5[%c0_5, %c0_6, %c0_7], %8 {strides = array<i32>} : memref<1x128x128xf32, #tpu.memory_space<vmem>>, vector<1x128x128xf32>,
    %9 = arith.subf %2, %5 : vector<128x128xf32>
    %c0_8 = arith.constant 0 : index
    %c0_9 = arith.constant 0 : index
    %c0_10 = arith.constant 0 : index
    %10 = vector.load %arg4[%c0_8, %c0_9, %c0_10] : memref<1x128x128xf32, #tpu.memory_space<vmem>>, vector<1x128x128xf32>
    %11 = vector.shape_cast %10 : vector<1x128x128xf32> to vector<128x128xf32>
    %12 = vector.shape_cast %9 : vector<128x128xf32> to vector<1x128x128xf32>
    tpu.vector_store %arg4[%c0_8, %c0_9, %c0_10], %12 {strides = array<i32>} : memref<1x128x128xf32, #tpu.memory_space<vmem>>, vector<1x128x128xf32>,
    return
  }
  func.func @transform_0(%arg0: i32, %arg1: i32) -> (i32, i32) {
    %c0_i32 = arith.constant 0 : i32
    %c0_i32_0 = arith.constant 0 : i32
    %c0_i32_1 = arith.constant 0 : i32
    return %c0_i32, %c0_i32_0 : i32, i32
  }
  func.func @transform_1(%arg0: i32, %arg1: i32) -> (i32, i32, i32) {
    %c0_i32 = arith.constant 0 : i32
    %c0_i32_0 = arith.constant 0 : i32
    return %arg0, %c0_i32, %arg1 : i32, i32, i32
  }
  func.func @transform_2(%arg0: i32, %arg1: i32) -> (i32, i32, i32) {
    %c0_i32 = arith.constant 0 : i32
    %c0_i32_0 = arith.constant 0 : i32
    return %arg0, %c0_i32, %arg1 : i32, i32, i32
  }
  func.func @transform_3(%arg0: i32, %arg1: i32) -> (i32, i32, i32) {
    %c0_i32 = arith.constant 0 : i32
    %c0_i32_0 = arith.constant 0 : i32
    return %arg0, %c0_i32, %arg1 : i32, i32, i32
  }
}

</mosaic_0001>

<llo_original>
// kernel: tpu_custom_call.1
$region0: #{tpu_custom_call.1}
  #allocation0 [shape = 'u32[]', space=smem, size = 0x4, offset = 0x4, fixed_abs, tag = 'smem constant byte address 0x4 - core index']
  #allocation1 [shape = 'u32[144,128]{1,0:T(1,128)}', space=vmem, size = 0x12000, scoped, tag = 'internal scratch']
  %s0 = inlined_call_operand.hbm [shape: f32[128,128], index: 0, kind: input, shape index: {}]
  %s1 = inlined_call_operand.hbm [shape: f32[2,128,128], index: 1, kind: input, shape index: {}]
  %s2 = inlined_call_operand.hbm [shape: f32[2,128,128], index: 2, kind: output, shape index: {0}]
  %s3 = inlined_call_operand.hbm [shape: f32[2,128,128], index: 3, kind: output, shape index: {1}]
  %4 = xla_tuple %s2, %s3
  %s5 = sld [smem:[#allocation0]]
  $region57: #{tpu_custom_call.1} parent=0
    _
  %s7 = ssub.s32 1, %s5
  %s8 = scalar_select 0, %s7, %s5
  $region1: #{tpu_custom_call.1} parent=0
    #allocation2 [shape = 'u8[65536]{0}', space=vmem, size = 0x10000, scoped, tag = 'input window, operand 0, single buffered']
    #allocation3 [shape = 's32[2]{0}', space=sflag, size = 0x8, scoped, tag = 'scoped memory for tpu_custom_call.1']
    #allocation4 [shape = 's32[2]{0}', space=sflag, size = 0x8, scoped, tag = 'scoped memory for tpu_custom_call.1']
    #allocation5 [shape = 'u8[131072]{0}', space=vmem, size = 0x20000, scoped, tag = 'input window, operand 1']
    #allocation6 [shape = 's32[2]{0}', space=sflag, size = 0x8, scoped, tag = 'scoped memory for tpu_custom_call.1']
    #allocation7 [shape = 'u8[131072]{0}', space=vmem, size = 0x20000, scoped, tag = 'output window, operand 0']
    #allocation8 [shape = 'u8[131072]{0}', space=vmem, size = 0x20000, scoped, tag = 'output window, operand 1']
    #allocation9 [shape = 's32[2]{0}', space=sflag, size = 0x8, scoped, tag = 'scoped memory for tpu_custom_call.1']
    %9 = vsyncpa [#allocation3], 0
    %10 = vsyncpa [#allocation6], 0
    %s11 = scalar_lea.sflag [#allocation6], 1
    %12 = vsyncpa %s11, 0
    %13 = vsyncpa [#allocation4], 0
    %s14 = scalar_lea.sflag [#allocation4], 1
    %15 = vsyncpa %s14, 0
    %16 = vsyncpa [#allocation9], 0
    %s17 = scalar_lea.sflag [#allocation9], 1
    %18 = vsyncpa %s17, 0
    loop: start=0, step=1, limit=4
    $region2: #{tpu_custom_call.1} parent=1 // loop_pre_header
      _
    $region3: #{tpu_custom_call.1} parent=1 // loop_header
      %s20 = sphi 0, %s24
      %p21 = scmp.ge.s32.totalorder %s20, 4
      %s27 = sphi 0, %s39
      %s28 = sphi 0, %s35
      %s29 = sphi 0, %s27
      %s30 = sphi 0, %s28
      %s31 = sphi 0, %s29
      %s32 = sphi 0, %s30
      %s40 = sphi 0, %s40
      %s42 = sphi 0, %s40
      %s43 = sphi 0, %s42
      %s57 = sphi 0, %s43
      %s65 = sphi 0, %s67
      %s68 = sphi 0, %s65
      %s69 = sphi 0, %s68
      %s85 = sphi 0, %s69
      %s93 = sphi 0, %s95
      %s96 = sphi 0, %s93
      %s97 = sphi 0, %s96
      %s113 = sphi 0, %s97
      %s121 = sphi 0, %s123
      %s124 = sphi 0, %s121
      %s125 = sphi 0, %s124
      %s141 = sphi 0, %s125
    $region4: #{tpu_custom_call.1} parent=1 // loop_header_branch
      %23 = sbr.rel (%p21) target = $region8
    $region5: #{tpu_custom_call.1} parent=1 // loop_body
      %s25 = ssub.s32 %s20, 1
      %s26 = ssub.s32 %s20, 2
      %s33 = sadd.s32 1, %s28
      %p34 = scmp.ge.s32.totalorder %s33, 1
      %s35 = scalar_select %p34, 0, %s33
      %s36 = sadd.s32 1, %s27
      %s37 = scalar_select %p34, %s36, %s27
      %p38 = scmp.ge.s32.totalorder %s37, 2
      %s39 = scalar_select %p38, 0, %s37
      %s41 = sadd.s32 %s40, 1
      %p44 = scmp.eq.s32.totalorder %s20, 1
      %p45 = scmp.ne.s32.totalorder %s40, %s42
      %p46 = scmp.eq.s32.totalorder %s20, 0
      %p47 = por %p45, %p46
      %p48 = scmp.ne.s32.totalorder %s40, %s42
      %p49 = scmp.eq.s32.totalorder %s25, 1
      %p50 = por %p48, %p49
      %p51 = scmp.ne.s32.totalorder %s42, %s43
      %p52 = scmp.eq.s32.totalorder %s25, 0
      %p53 = por %p51, %p52
      %p54 = scmp.ne.s32.totalorder %s42, %s43
      %p55 = scmp.eq.s32.totalorder %s26, 1
      %p56 = por %p54, %p55
      %p58 = scmp.ne.s32.totalorder %s43, %s57
      %p59 = scmp.eq.s32.totalorder %s26, 0
      %p60 = por %p58, %p59
      %s61 = ssub.s32 %s27, %s39
      %s62 = ssub.s32 %s28, %s35
      %s63 = sor.u32 %s61, %s62
      %p64 = scmp.eq.s32.totalorder %s63, 0
      %s66 = sadd.s32 %s65, 1
      %s67 = scalar_select %p64, %s65, %s66
      %p70 = pneg %p64
      %p71 = scmp.eq.s32.totalorder %s20, 1
      %p72 = por %p70, %p71
      %p73 = scmp.ne.s32.totalorder %s65, %s68
      %p74 = scmp.eq.s32.totalorder %s20, 0
      %p75 = por %p73, %p74
      %p76 = scmp.ne.s32.totalorder %s65, %s68
      %p77 = scmp.eq.s32.totalorder %s25, 1
      %p78 = por %p76, %p77
      %p79 = scmp.ne.s32.totalorder %s68, %s69
      %p80 = scmp.eq.s32.totalorder %s25, 0
      %p81 = por %p79, %p80
      %p82 = scmp.ne.s32.totalorder %s68, %s69
      %p83 = scmp.eq.s32.totalorder %s26, 1
      %p84 = por %p82, %p83
      %p86 = scmp.ne.s32.totalorder %s69, %s85
      %p87 = scmp.eq.s32.totalorder %s26, 0
      %p88 = por %p86, %p87
      %s89 = ssub.s32 %s27, %s39
      %s90 = ssub.s32 %s28, %s35
      %s91 = sor.u32 %s89, %s90
      %p92 = scmp.eq.s32.totalorder %s91, 0
      %s94 = sadd.s32 %s93, 1
      %s95 = scalar_select %p92, %s93, %s94
      %p98 = pneg %p92
      %p99 = scmp.eq.s32.totalorder %s20, 1
      %p100 = por %p98, %p99
      %p101 = scmp.ne.s32.totalorder %s93, %s96
      %p102 = scmp.eq.s32.totalorder %s20, 0
      %p103 = por %p101, %p102
      %p104 = scmp.ne.s32.totalorder %s93, %s96
      %p105 = scmp.eq.s32.totalorder %s25, 1
      %p106 = por %p104, %p105
      %p107 = scmp.ne.s32.totalorder %s96, %s97
      %p108 = scmp.eq.s32.totalorder %s25, 0
      %p109 = por %p107, %p108
      %p110 = scmp.ne.s32.totalorder %s96, %s97
      %p111 = scmp.eq.s32.totalorder %s26, 1
      %p112 = por %p110, %p111
      %p114 = scmp.ne.s32.totalorder %s97, %s113
      %p115 = scmp.eq.s32.totalorder %s26, 0
      %p116 = por %p114, %p115
      %s117 = ssub.s32 %s27, %s39
      %s118 = ssub.s32 %s28, %s35
      %s119 = sor.u32 %s117, %s118
      %p120 = scmp.eq.s32.totalorder %s119, 0
      %s122 = sadd.s32 %s121, 1
      %s123 = scalar_select %p120, %s121, %s122
      %p126 = pneg %p120
      %p127 = scmp.eq.s32.totalorder %s20, 1
      %p128 = por %p126, %p127
      %p129 = scmp.ne.s32.totalorder %s121, %s124
      %p130 = scmp.eq.s32.totalorder %s20, 0
      %p131 = por %p129, %p130
      %p132 = scmp.ne.s32.totalorder %s121, %s124
      %p133 = scmp.eq.s32.totalorder %s25, 1
      %p134 = por %p132, %p133
      %p135 = scmp.ne.s32.totalorder %s124, %s125
      %p136 = scmp.eq.s32.totalorder %s25, 0
      %p137 = por %p135, %p136
      %p138 = scmp.ne.s32.totalorder %s124, %s125
      %p139 = scmp.eq.s32.totalorder %s26, 1
      %p140 = por %p138, %p139
      %p142 = scmp.ne.s32.totalorder %s125, %s141
      %p143 = scmp.eq.s32.totalorder %s26, 0
      %p144 = por %p142, %p143
      %p145 = scmp.le.s32.totalorder 1, %s20
      %p146 = scmp.lt.s32.totalorder %s20, 3
      %p147 = pnand %p145, %p146
      %p148 = pneg %p147
      // Predicated region
      $region9: #{tpu_custom_call.1} parent=5 // pred_check
        _
      $region10: #{tpu_custom_call.1} parent=5 // pred_check_branch
        %150 = sbr.rel (%p147) target = $region12
      $region11: #{tpu_custom_call.1} parent=5 // pred_region
        %s151 = ssub.s32 %s20, 1
        // Predicated region
        $region13: #{tpu_custom_call.1} parent=11 // pred_check
          %p152 = pneg %p53
        $region14: #{tpu_custom_call.1} parent=11 // pred_check_branch
          %154 = sbr.rel (%p152) target = $region16
        $region15: #{tpu_custom_call.1} parent=11 // pred_region
          %s156 = ssub.s32 2048, 2048
          %157 = vsyncadd [#allocation3], %s156
          %s158 = sshll.u32 [#allocation2], 4
          %s159 = int_to_ptr.vmem [resolvable:$true] %s158
          %164 = dma.hbm_to_vmem [thread:$0]  %s0, 2048, %s159, [#allocation3], 128, 128, 8
        $region16: #{tpu_custom_call.1} parent=11 // pred_fallthru
          _
      $region12: #{tpu_custom_call.1} parent=5 // pred_fallthru
        _
      %p165 = scmp.lt.s32.totalorder %s20, 2
      // Predicated region
      $region17: #{tpu_custom_call.1} parent=5 // pred_check
        %p166 = pneg %p165
      $region18: #{tpu_custom_call.1} parent=5 // pred_check_branch
        %168 = sbr.rel (%p166) target = $region20
      $region19: #{tpu_custom_call.1} parent=5 // pred_region
        // Predicated region
        $region21: #{tpu_custom_call.1} parent=19 // pred_check
          %p169 = pneg %p75
        $region22: #{tpu_custom_call.1} parent=19 // pred_check_branch
          %171 = sbr.rel (%p169) target = $region24
        $region23: #{tpu_custom_call.1} parent=19 // pred_region
          %s172 = sand.u32 %s65, 1
          %s173 = scalar_lea.sflag [#allocation6], %s172
          %s174 = sand.u32 %s65, 1
          %s175 = smul.addr %s174, 128
          %s176 = scalar_lea.vmem [#allocation5], %s175
          %s178 = ssub.s32 2048, 2048
          %179 = vsyncadd %s173, %s178
          %s180 = smul.addr %s27, 16
          %s181 = sadd.s32 %s28, %s180
          %s182 = smul.addr %s181, 128
          %s183 = scalar_lea.hbm %s1, %s182
          %s184 = sshll.u32 %s176, 4
          %s185 = int_to_ptr.vmem [resolvable:$true] %s184
          %190 = dma.hbm_to_vmem [thread:$0]  %s183, 2048, %s185, %s173, 128, 128, 8
        $region24: #{tpu_custom_call.1} parent=19 // pred_fallthru
          _
      $region20: #{tpu_custom_call.1} parent=5 // pred_fallthru
        _
      %p191 = scmp.le.s32.totalorder 1, %s20
      %p192 = scmp.lt.s32.totalorder %s20, 3
      %p193 = pnand %p191, %p192
      %p194 = pneg %p193
      // Predicated region
      $region25: #{tpu_custom_call.1} parent=5 // pred_check
        _
      $region26: #{tpu_custom_call.1} parent=5 // pred_check_branch
        %196 = sbr.rel (%p193) target = $region28
      $region27: #{tpu_custom_call.1} parent=5 // pred_region
        %s197 = ssub.s32 %s20, 1
        // Predicated region
        $region29: #{tpu_custom_call.1} parent=27 // pred_check
          %p198 = pneg %p53
        $region30: #{tpu_custom_call.1} parent=27 // pred_check_branch
          %200 = sbr.rel (%p198) target = $region32
        $region31: #{tpu_custom_call.1} parent=27 // pred_region
          %201 = dma.done [#allocation3], 2048
        $region32: #{tpu_custom_call.1} parent=27 // pred_fallthru
          _
        %s202 = sand.u32 %s68, 1
        %s203 = scalar_lea.sflag [#allocation6], %s202
        %s204 = sand.u32 %s68, 1
        %s205 = smul.addr %s204, 128
        %s206 = scalar_lea.vmem [#allocation5], %s205
        // Predicated region
        $region33: #{tpu_custom_call.1} parent=27 // pred_check
          %p207 = pneg %p81
        $region34: #{tpu_custom_call.1} parent=27 // pred_check_branch
          %209 = sbr.rel (%p207) target = $region36
        $region35: #{tpu_custom_call.1} parent=27 // pred_region
          %210 = dma.done %s203, 2048
        $region36: #{tpu_custom_call.1} parent=27 // pred_fallthru
          _
        %p211 = pneg %p53
        %p212 = pneg %p50
        %s213 = sand.u32 %s68, 1
        %s214 = scalar_lea.sflag [#allocation6], %s213
        %s215 = sand.u32 %s68, 1
        %s216 = smul.addr %s215, 128
        %s217 = scalar_lea.vmem [#allocation5], %s216
        %p218 = pneg %p81
        %p219 = pneg %p78
        %p220 = pneg %p109
        %p221 = pneg %p106
        %s222 = sand.u32 %s96, 1
        %s223 = scalar_lea.sflag [#allocation4], %s222
        %s224 = sand.u32 %s96, 1
        %s225 = smul.addr %s224, 128
        %s226 = scalar_lea.vmem [#allocation7], %s225
        %p227 = pneg %p137
        %p228 = pneg %p134
        %s229 = sand.u32 %s124, 1
        %s230 = scalar_lea.sflag [#allocation9], %s229
        %s231 = sand.u32 %s124, 1
        %s232 = smul.addr %s231, 128
        %s233 = scalar_lea.vmem [#allocation8], %s232
        %v234 = vld [vmem:[#allocation2] sm:$0xff]
        %v235 = vld [vmem:[#allocation2 + $0x8] sm:$0xff]
        %v236 = vld [vmem:[#allocation2 + $0x10] sm:$0xff]
        %v237 = vld [vmem:[#allocation2 + $0x18] sm:$0xff]
        %v238 = vld [vmem:[#allocation2 + $0x20] sm:$0xff]
        %v239 = vld [vmem:[#allocation2 + $0x28] sm:$0xff]
        %v240 = vld [vmem:[#allocation2 + $0x30] sm:$0xff]
        %v241 = vld [vmem:[#allocation2 + $0x38] sm:$0xff]
        %v242 = vld [vmem:[#allocation2 + $0x40] sm:$0xff]
        %v243 = vld [vmem:[#allocation2 + $0x48] sm:$0xff]
        %v244 = vld [vmem:[#allocation2 + $0x50] sm:$0xff]
        %v245 = vld [vmem:[#allocation2 + $0x58] sm:$0xff]
        %v246 = vld [vmem:[#allocation2 + $0x60] sm:$0xff]
        %v247 = vld [vmem:[#allocation2 + $0x68] sm:$0xff]
        %v248 = vld [vmem:[#allocation2 + $0x70] sm:$0xff]
        %v249 = vld [vmem:[#allocation2 + $0x78] sm:$0xff]
        %v250 = vld [vmem:[%s206] sm:$0xff]
        %v251 = vld [vmem:[%s206 + $0x8] sm:$0xff]
        %v252 = vld [vmem:[%s206 + $0x10] sm:$0xff]
        %v253 = vld [vmem:[%s206 + $0x18] sm:$0xff]
        %v254 = vld [vmem:[%s206 + $0x20] sm:$0xff]
        %v255 = vld [vmem:[%s206 + $0x28] sm:$0xff]
        %v256 = vld [vmem:[%s206 + $0x30] sm:$0xff]
        %v257 = vld [vmem:[%s206 + $0x38] sm:$0xff]
        %v258 = vld [vmem:[%s206 + $0x40] sm:$0xff]
        %v259 = vld [vmem:[%s206 + $0x48] sm:$0xff]
        %v260 = vld [vmem:[%s206 + $0x50] sm:$0xff]
        %v261 = vld [vmem:[%s206 + $0x58] sm:$0xff]
        %v262 = vld [vmem:[%s206 + $0x60] sm:$0xff]
        %v263 = vld [vmem:[%s206 + $0x68] sm:$0xff]
        %v264 = vld [vmem:[%s206 + $0x70] sm:$0xff]
        %v265 = vld [vmem:[%s206 + $0x78] sm:$0xff]
        %266 = vmatprep.subr.mxu0 0.0
        %267 = vmatpush1.msra.mxu0 %v250
        %268 = vmatprep.subr.mxu0 0.0
        %269 = vmatpush1.msra.mxu0 %v251
        %270 = vmatprep.subr.mxu0 0.0
        %271 = vmatpush1.msra.mxu0 %v252
        %272 = vmatprep.subr.mxu0 0.0
        %273 = vmatpush1.msra.mxu0 %v253
        %274 = vmatprep.subr.mxu0 0.0
        %275 = vmatpush1.msra.mxu0 %v254
        %276 = vmatprep.subr.mxu0 0.0
        %277 = vmatpush1.msra.mxu0 %v255
        %278 = vmatprep.subr.mxu0 0.0
        %279 = vmatpush1.msra.mxu0 %v256
        %280 = vmatprep.subr.mxu0 0.0
        %281 = vmatpush1.msra.mxu0 %v257
        %282 = vmatprep.subr.mxu0 0.0
        %283 = vmatpush1.msra.mxu0 %v258
        %284 = vmatprep.subr.mxu0 0.0
        %285 = vmatpush1.msra.mxu0 %v259
        %286 = vmatprep.subr.mxu0 0.0
        %287 = vmatpush1.msra.mxu0 %v260
        %288 = vmatprep.subr.mxu0 0.0
        %289 = vmatpush1.msra.mxu0 %v261
        %290 = vmatprep.subr.mxu0 0.0
        %291 = vmatpush1.msra.mxu0 %v262
        %292 = vmatprep.subr.mxu0 0.0
        %293 = vmatpush1.msra.mxu0 %v263
        %294 = vmatprep.subr.mxu0 0.0
        %295 = vmatpush1.msra.mxu0 %v264
        %296 = vmatprep.subr.mxu0 0.0
        %297 = vmatpush1.msra.mxu0 %v265
        %298 = vmatprep.subr.mxu0 0.0
        %299 = vmatpush1.msra.mxu0 0.0
        %300 = vmatprep.subr.mxu0 0.0
        %301 = vmatpush1.msra.mxu0 0.0
        %302 = vmatprep.subr.mxu0 0.0
        %303 = vmatpush1.msra.mxu0 0.0
        %304 = vmatprep.subr.mxu0 0.0
        %305 = vmatpush1.msra.mxu0 0.0
        %306 = vmatprep.subr.mxu0 0.0
        %307 = vmatpush1.msra.mxu0 0.0
        %308 = vmatprep.subr.mxu0 0.0
        %309 = vmatpush1.msra.mxu0 0.0
        %310 = vmatprep.subr.mxu0 0.0
        %311 = vmatpush1.msra.mxu0 0.0
        %312 = vmatprep.subr.mxu0 0.0
        %313 = vmatpush1.msra.mxu0 0.0
        %314 = vmatprep.subr.mxu0 0.0
        %315 = vmatpush1.msra.mxu0 0.0
        %316 = vmatprep.subr.mxu0 0.0
        %317 = vmatpush1.msra.mxu0 0.0
        %318 = vmatprep.subr.mxu0 0.0
        %319 = vmatpush1.msra.mxu0 0.0
        %320 = vmatprep.subr.mxu0 0.0
        %321 = vmatpush1.msra.mxu0 0.0
        %322 = vmatprep.subr.mxu0 0.0
        %323 = vmatpush1.msra.mxu0 0.0
        %324 = vmatprep.subr.mxu0 0.0
        %325 = vmatpush1.msra.mxu0 0.0
        %326 = vmatprep.subr.mxu0 0.0
        %327 = vmatpush1.msra.mxu0 0.0
        %328 = vmatprep.subr.mxu0 0.0
        %329 = vmatpush1.msra.mxu0 0.0
        %330 = vmatprep.mubr.f32.mxu0 0.0
        %331 = vmatmul.mubr.f32.gmra.mrb[0].mxu0 %v234
        %v332 = vpop.f32.mrb[0].mxu0
        %v333 = vadd.f32 0.0, %v332
        %v334 = vpop.f32.mrb[0].mxu0
        %335 = vmatprep.mubr.f32.mxu0 0.0
        %336 = vmatmul.mubr.f32.gmra.mrb[0].mxu0 %v235
        %v337 = vpop.f32.mrb[0].mxu0
        %v338 = vadd.f32 0.0, %v337
        %v339 = vpop.f32.mrb[0].mxu0
        %340 = vmatprep.mubr.f32.mxu0 0.0
        %341 = vmatmul.mubr.f32.gmra.mrb[0].mxu0 %v236
        %v342 = vpop.f32.mrb[0].mxu0
        %v343 = vadd.f32 0.0, %v342
        %v344 = vpop.f32.mrb[0].mxu0
        %345 = vmatprep.mubr.f32.mxu0 0.0
        %346 = vmatmul.mubr.f32.gmra.mrb[0].mxu0 %v237
        %v347 = vpop.f32.mrb[0].mxu0
        %v348 = vadd.f32 0.0, %v347
        %v349 = vpop.f32.mrb[0].mxu0
        %350 = vmatprep.mubr.f32.mxu0 0.0
        %351 = vmatmul.mubr.f32.gmra.mrb[0].mxu0 %v238
        %v352 = vpop.f32.mrb[0].mxu0
        %v353 = vadd.f32 0.0, %v352
        %v354 = vpop.f32.mrb[0].mxu0
        %355 = vmatprep.mubr.f32.mxu0 0.0
        %356 = vmatmul.mubr.f32.gmra.mrb[0].mxu0 %v239
        %v357 = vpop.f32.mrb[0].mxu0
        %v358 = vadd.f32 0.0, %v357
        %v359 = vpop.f32.mrb[0].mxu0
        %360 = vmatprep.mubr.f32.mxu0 0.0
        %361 = vmatmul.mubr.f32.gmra.mrb[0].mxu0 %v240
        %v362 = vpop.f32.mrb[0].mxu0
        %v363 = vadd.f32 0.0, %v362
        %v364 = vpop.f32.mrb[0].mxu0
        %365 = vmatprep.mubr.f32.mxu0 0.0
        %366 = vmatmul.mubr.f32.gmra.mrb[0].mxu0 %v241
        %v367 = vpop.f32.mrb[0].mxu0
        %v368 = vadd.f32 0.0, %v367
        %v369 = vpop.f32.mrb[0].mxu0
        %370 = vmatprep.mubr.f32.mxu0 0.0
        %371 = vmatmul.mubr.f32.gmra.mrb[0].mxu0 %v242
        %v372 = vpop.f32.mrb[0].mxu0
        %v373 = vadd.f32 0.0, %v372
        %v374 = vpop.f32.mrb[0].mxu0
        %375 = vmatprep.mubr.f32.mxu0 0.0
        %376 = vmatmul.mubr.f32.gmra.mrb[0].mxu0 %v243
        %v377 = vpop.f32.mrb[0].mxu0
        %v378 = vadd.f32 0.0, %v377
        %v379 = vpop.f32.mrb[0].mxu0
        %380 = vmatprep.mubr.f32.mxu0 0.0
        %381 = vmatmul.mubr.f32.gmra.mrb[0].mxu0 %v244
        %v382 = vpop.f32.mrb[0].mxu0
        %v383 = vadd.f32 0.0, %v382
        %v384 = vpop.f32.mrb[0].mxu0
        %385 = vmatprep.mubr.f32.mxu0 0.0
        %386 = vmatmul.mubr.f32.gmra.mrb[0].mxu0 %v245
        %v387 = vpop.f32.mrb[0].mxu0
        %v388 = vadd.f32 0.0, %v387
        %v389 = vpop.f32.mrb[0].mxu0
        %390 = vmatprep.mubr.f32.mxu0 0.0
        %391 = vmatmul.mubr.f32.gmra.mrb[0].mxu0 %v246
        %v392 = vpop.f32.mrb[0].mxu0
        %v393 = vadd.f32 0.0, %v392
        %v394 = vpop.f32.mrb[0].mxu0
        %395 = vmatprep.mubr.f32.mxu0 0.0
        %396 = vmatmul.mubr.f32.gmra.mrb[0].mxu0 %v247
        %v397 = vpop.f32.mrb[0].mxu0
        %v398 = vadd.f32 0.0, %v397
        %v399 = vpop.f32.mrb[0].mxu0
        %400 = vmatprep.mubr.f32.mxu0 0.0
        %401 = vmatmul.mubr.f32.gmra.mrb[0].mxu0 %v248
        %v402 = vpop.f32.mrb[0].mxu0
        %v403 = vadd.f32 0.0, %v402
        %v404 = vpop.f32.mrb[0].mxu0
        %405 = vmatprep.mubr.f32.mxu0 0.0
        %406 = vmatmul.mubr.f32.gmra.mrb[0].mxu0 %v249
        %v407 = vpop.f32.mrb[0].mxu0
        %v408 = vadd.f32 0.0, %v407
        %v409 = vpop.f32.mrb[0].mxu0
        %410 = vdwg.mxu0
        %v411 = vmul.f32 %v333, 0.04
        %v412 = vmul.f32 %v338, 0.04
        %v413 = vmul.f32 %v343, 0.04
        %v414 = vmul.f32 %v348, 0.04
        %v415 = vmul.f32 %v353, 0.04
        %v416 = vmul.f32 %v358, 0.04
        %v417 = vmul.f32 %v363, 0.04
        %v418 = vmul.f32 %v368, 0.04
        %v419 = vmul.f32 %v373, 0.04
        %v420 = vmul.f32 %v378, 0.04
        %v421 = vmul.f32 %v383, 0.04
        %v422 = vmul.f32 %v388, 0.04
        %v423 = vmul.f32 %v393, 0.04
        %v424 = vmul.f32 %v398, 0.04
        %v425 = vmul.f32 %v403, 0.04
        %v426 = vmul.f32 %v408, 0.04
        %427 = vst [vmem:[%s233] sm:$0xff] %v411
        %428 = vst [vmem:[%s233 + $0x8] sm:$0xff] %v412
        %429 = vst [vmem:[%s233 + $0x10] sm:$0xff] %v413
        %430 = vst [vmem:[%s233 + $0x18] sm:$0xff] %v414
        %431 = vst [vmem:[%s233 + $0x20] sm:$0xff] %v415
        %432 = vst [vmem:[%s233 + $0x28] sm:$0xff] %v416
        %433 = vst [vmem:[%s233 + $0x30] sm:$0xff] %v417
        %434 = vst [vmem:[%s233 + $0x38] sm:$0xff] %v418
        %435 = vst [vmem:[%s233 + $0x40] sm:$0xff] %v419
        %436 = vst [vmem:[%s233 + $0x48] sm:$0xff] %v420
        %437 = vst [vmem:[%s233 + $0x50] sm:$0xff] %v421
        %438 = vst [vmem:[%s233 + $0x58] sm:$0xff] %v422
        %439 = vst [vmem:[%s233 + $0x60] sm:$0xff] %v423
        %440 = vst [vmem:[%s233 + $0x68] sm:$0xff] %v424
        %441 = vst [vmem:[%s233 + $0x70] sm:$0xff] %v425
        %442 = vst [vmem:[%s233 + $0x78] sm:$0xff] %v426
        %v443 = vsub.f32 %v250, %v411
        %v444 = vsub.f32 %v251, %v412
        %v445 = vsub.f32 %v252, %v413
        %v446 = vsub.f32 %v253, %v414
        %v447 = vsub.f32 %v254, %v415
        %v448 = vsub.f32 %v255, %v416
        %v449 = vsub.f32 %v256, %v417
        %v450 = vsub.f32 %v257, %v418
        %v451 = vsub.f32 %v258, %v419
        %v452 = vsub.f32 %v259, %v420
        %v453 = vsub.f32 %v260, %v421
        %v454 = vsub.f32 %v261, %v422
        %v455 = vsub.f32 %v262, %v423
        %v456 = vsub.f32 %v263, %v424
        %v457 = vsub.f32 %v264, %v425
        %v458 = vsub.f32 %v265, %v426
        %459 = vst [vmem:[%s226] sm:$0xff] %v443
        %460 = vst [vmem:[%s226 + $0x8] sm:$0xff] %v444
        %461 = vst [vmem:[%s226 + $0x10] sm:$0xff] %v445
        %462 = vst [vmem:[%s226 + $0x18] sm:$0xff] %v446
        %463 = vst [vmem:[%s226 + $0x20] sm:$0xff] %v447
        %464 = vst [vmem:[%s226 + $0x28] sm:$0xff] %v448
        %465 = vst [vmem:[%s226 + $0x30] sm:$0xff] %v449
        %466 = vst [vmem:[%s226 + $0x38] sm:$0xff] %v450
        %467 = vst [vmem:[%s226 + $0x40] sm:$0xff] %v451
        %468 = vst [vmem:[%s226 + $0x48] sm:$0xff] %v452
        %469 = vst [vmem:[%s226 + $0x50] sm:$0xff] %v453
        %470 = vst [vmem:[%s226 + $0x58] sm:$0xff] %v454
        %471 = vst [vmem:[%s226 + $0x60] sm:$0xff] %v455
        %472 = vst [vmem:[%s226 + $0x68] sm:$0xff] %v456
        %473 = vst [vmem:[%s226 + $0x70] sm:$0xff] %v457
        %474 = vst [vmem:[%s226 + $0x78] sm:$0xff] %v458
        %s475 = sand.u32 %s96, 1
        %s476 = scalar_lea.sflag [#allocation4], %s475
        %s477 = sand.u32 %s96, 1
        %s478 = smul.addr %s477, 128
        %s479 = scalar_lea.vmem [#allocation7], %s478
        %s480 = sand.u32 %s124, 1
        %s481 = scalar_lea.sflag [#allocation9], %s480
        %s482 = sand.u32 %s124, 1
        %s483 = smul.addr %s482, 128
        %s484 = scalar_lea.vmem [#allocation8], %s483
        // Predicated region
        $region37: #{tpu_custom_call.1} parent=27 // pred_check
          %p485 = pneg %p106
        $region38: #{tpu_custom_call.1} parent=27 // pred_check_branch
          %487 = sbr.rel (%p485) target = $region40
        $region39: #{tpu_custom_call.1} parent=27 // pred_region
          %s489 = ssub.s32 2048, 2048
          %490 = vsyncadd %s476, %s489
          %s491 = smul.addr %s29, 16
          %s492 = sadd.s32 %s30, %s491
          %s493 = smul.addr %s492, 128
          %s494 = scalar_lea.hbm %s2, %s493
          %s495 = sshll.u32 %s479, 4
          %s496 = int_to_ptr.vmem [resolvable:$true] %s495
          %501 = dma.vmem_to_hbm [thread:$0]  %s496, 2048, %s494, %s476, 128, 128, 8
        $region40: #{tpu_custom_call.1} parent=27 // pred_fallthru
          _
        // Predicated region
        $region41: #{tpu_custom_call.1} parent=27 // pred_check
          %p502 = pneg %p134
        $region42: #{tpu_custom_call.1} parent=27 // pred_check_branch
          %504 = sbr.rel (%p502) target = $region44
        $region43: #{tpu_custom_call.1} parent=27 // pred_region
          %s506 = ssub.s32 2048, 2048
          %507 = vsyncadd %s481, %s506
          %s508 = smul.addr %s29, 16
          %s509 = sadd.s32 %s30, %s508
          %s510 = smul.addr %s509, 128
          %s511 = scalar_lea.hbm %s3, %s510
          %s512 = sshll.u32 %s484, 4
          %s513 = int_to_ptr.vmem [resolvable:$true] %s512
          %518 = dma.vmem_to_hbm [thread:$0]  %s513, 2048, %s511, %s481, 128, 128, 8
        $region44: #{tpu_custom_call.1} parent=27 // pred_fallthru
          _
      $region28: #{tpu_custom_call.1} parent=5 // pred_fallthru
        _
      %p519 = scmp.le.s32.totalorder 2, %s20
      // Predicated region
      $region45: #{tpu_custom_call.1} parent=5 // pred_check
        %p520 = pneg %p519
      $region46: #{tpu_custom_call.1} parent=5 // pred_check_branch
        %522 = sbr.rel (%p520) target = $region48
      $region47: #{tpu_custom_call.1} parent=5 // pred_region
        %s523 = ssub.s32 %s20, 2
        // Predicated region
        $region49: #{tpu_custom_call.1} parent=47 // pred_check
          %p524 = pneg %p112
        $region50: #{tpu_custom_call.1} parent=47 // pred_check_branch
          %526 = sbr.rel (%p524) target = $region52
        $region51: #{tpu_custom_call.1} parent=47 // pred_region
          %s527 = sand.u32 %s97, 1
          %s528 = scalar_lea.sflag [#allocation4], %s527
          %s529 = sand.u32 %s97, 1
          %s530 = smul.addr %s529, 128
          %s531 = scalar_lea.vmem [#allocation7], %s530
          %532 = dma.done %s528, 2048
        $region52: #{tpu_custom_call.1} parent=47 // pred_fallthru
          _
        // Predicated region
        $region53: #{tpu_custom_call.1} parent=47 // pred_check
          %p533 = pneg %p140
        $region54: #{tpu_custom_call.1} parent=47 // pred_check_branch
          %535 = sbr.rel (%p533) target = $region56
        $region55: #{tpu_custom_call.1} parent=47 // pred_region
          %s536 = sand.u32 %s125, 1
          %s537 = scalar_lea.sflag [#allocation9], %s536
          %s538 = sand.u32 %s125, 1
          %s539 = smul.addr %s538, 128
          %s540 = scalar_lea.vmem [#allocation8], %s539
          %541 = dma.done %s537, 2048
        $region56: #{tpu_custom_call.1} parent=47 // pred_fallthru
          _
      $region48: #{tpu_custom_call.1} parent=5 // pred_fallthru
        _
    $region6: #{tpu_custom_call.1} parent=1 // loop_footer
      %s24 = sadd.s32 1, %s20
    $region7: #{tpu_custom_call.1} parent=1 // loop_footer_branch
      %19 = sbr.rel target = $region3
    $region8: #{tpu_custom_call.1} parent=1 // loop_exit
      _
    %542 = vsyncpa [#allocation3], 1
    %s543 = scalar_lea.sflag [#allocation3], 1
    %544 = vsyncpa %s543, 1
    %545 = vsyncpa [#allocation6], 1
    %s546 = scalar_lea.sflag [#allocation6], 1
    %547 = vsyncpa %s546, 1
    %548 = vsyncpa [#allocation4], 1
    %s549 = scalar_lea.sflag [#allocation4], 1
    %550 = vsyncpa %s549, 1
    %551 = vsyncpa [#allocation9], 1
    %s552 = scalar_lea.sflag [#allocation9], 1
    %553 = vsyncpa %s552, 1

</llo_original>
